<compile_context>
chip_gen: v6e
topology: v6e:2x2x1
jax: 0.10.0
libtpu: 0.0.40
codegen_flags: <defaults>
</compile_context>

<pallas_src>
import numpy as np
import jax
import jax.numpy as jnp
from jax.experimental import pallas as pl
from jax.experimental.pallas import tpu as pltpu

_LANES = 128          # TPU vreg lane width
_MAX_TILE_ROWS = 512  # 512 x 128 x 4B = 256 KiB per operand tile


def _add_kernel(a_ref, b_ref, o_ref):
    o_ref[...] = a_ref[...] + b_ref[...]


def pallas_add(x0, x1):
    """Elementwise x0 + x1 (same shape) via a lane-dense Pallas TPU kernel."""
    # TODO(synk): torch.add broadcasting between differently-shaped operands is
    # not implemented; this module is exercised with equal-shape inputs.
    assert x0.shape == x1.shape, (x0.shape, x1.shape)
    out_dtype = jnp.result_type(x0.dtype, x1.dtype)
    orig_shape = x0.shape
    n = int(np.prod(orig_shape))

    # Choose a lane-dense (rows, 128) presentation, padded so the block shape
    # satisfies the (8, 128) tiling constraint and divides the array evenly.
    rows_needed = pl.cdiv(n, _LANES)
    if rows_needed <= _MAX_TILE_ROWS:
        tile_rows = max(8, pl.cdiv(rows_needed, 8) * 8)
        grid_rows = 1
    else:
        tile_rows = _MAX_TILE_ROWS
        grid_rows = pl.cdiv(rows_needed, tile_rows)
    rows_padded = grid_rows * tile_rows
    padded = rows_padded * _LANES

    def _prep(x):
        flat = jnp.ravel(x).astype(out_dtype)
        if padded != n:
            flat = jnp.pad(flat, (0, padded - n))
        return flat.reshape(rows_padded, _LANES)

    a2 = _prep(x0)
    b2 = _prep(x1)

    out2 = pl.pallas_call(
        _add_kernel,
        out_shape=jax.ShapeDtypeStruct((rows_padded, _LANES), out_dtype),
        grid_spec=pltpu.PrefetchScalarGridSpec(
            num_scalar_prefetch=0,
            grid=(grid_rows,),
            in_specs=[
                pl.BlockSpec((tile_rows, _LANES), lambda i: (i, 0)),
                pl.BlockSpec((tile_rows, _LANES), lambda i: (i, 0)),
            ],
            out_specs=pl.BlockSpec((tile_rows, _LANES), lambda i: (i, 0)),
        ),
        compiler_params=pltpu.CompilerParams(
            dimension_semantics=("parallel",)),
    )(a2, b2)

    return out2.reshape(-1)[:n].reshape(orig_shape)


if __name__ == "__main__":
    key = jax.random.PRNGKey(0)
    k0, k1 = jax.random.split(key)
    # The module's forward takes x = [x0, x1]; use NCHW-like (2, 4, 16, 16).
    shape = (2, 4, 16, 16)
    x0 = jax.random.normal(k0, shape, jnp.float32)
    x1 = jax.random.normal(k1, shape, jnp.float32)

    out = pallas_add(x0, x1)
    out = jax.block_until_ready(out)

    ref = x0 + x1
    np.testing.assert_allclose(np.asarray(out), np.asarray(ref),
                               rtol=1e-6, atol=1e-6)
    print("KERNEL_OK")
</pallas_src>

<mosaic_0001>
module attributes {stable_mosaic.version = 11 : i64} {
  func.func @_add_kernel(%arg0: i32, %arg1: memref<16x128xf32, #tpu.memory_space<vmem>>, %arg2: memref<16x128xf32, #tpu.memory_space<vmem>>, %arg3: memref<16x128xf32, #tpu.memory_space<vmem>>) attributes {dimension_semantics = [#tpu.dimension_semantics<parallel>], iteration_bounds = array<i64: 1>, scalar_prefetch = 0 : i64, scratch_operands = 0 : i64, tpu.core_type = #tpu.core_type<tc>, window_params = [{transform_indices = @transform_0, window_bounds = array<i64: 16, 128>}, {transform_indices = @transform_1, window_bounds = array<i64: 16, 128>}, {transform_indices = @transform_2, window_bounds = array<i64: 16, 128>}]} {
    %c0 = arith.constant 0 : index
    %c0_0 = arith.constant 0 : index
    %0 = vector.load %arg1[%c0, %c0_0] : memref<16x128xf32, #tpu.memory_space<vmem>>, vector<16x128xf32>
    %c0_1 = arith.constant 0 : index
    %c0_2 = arith.constant 0 : index
    %1 = vector.load %arg2[%c0_1, %c0_2] : memref<16x128xf32, #tpu.memory_space<vmem>>, vector<16x128xf32>
    %2 = arith.addf %0, %1 : vector<16x128xf32>
    %c0_3 = arith.constant 0 : index
    %c0_4 = arith.constant 0 : index
    %3 = vector.load %arg3[%c0_3, %c0_4] : memref<16x128xf32, #tpu.memory_space<vmem>>, vector<16x128xf32>
    tpu.vector_store %arg3[%c0_3, %c0_4], %2 {strides = array<i32>} : memref<16x128xf32, #tpu.memory_space<vmem>>, vector<16x128xf32>,
    return
  }
  func.func @transform_0(%arg0: i32) -> (i32, i32) {
    %c0_i32 = arith.constant 0 : i32
    %c0_i32_0 = arith.constant 0 : i32
    return %arg0, %c0_i32 : i32, i32
  }
  func.func @transform_1(%arg0: i32) -> (i32, i32) {
    %c0_i32 = arith.constant 0 : i32
    %c0_i32_0 = arith.constant 0 : i32
    return %arg0, %c0_i32 : i32, i32
  }
  func.func @transform_2(%arg0: i32) -> (i32, i32) {
    %c0_i32 = arith.constant 0 : i32
    %c0_i32_0 = arith.constant 0 : i32
    return %arg0, %c0_i32 : i32, i32
  }
}

</mosaic_0001>

<llo_original>
// kernel: tpu_custom_call.1
$region0: #{tpu_custom_call.1}
  #allocation0 [shape = 'u32[]', space=smem, size = 0x4, offset = 0x4, fixed_abs, tag = 'smem constant byte address 0x4 - core index']
  #allocation1 [shape = 'u32[144,128]{1,0:T(1,128)}', space=vmem, size = 0x12000, scoped, tag = 'internal scratch']
  %s0 = inlined_call_operand.hbm [shape: f32[16,128], index: 0, kind: input, shape index: {}]
  %s1 = inlined_call_operand.hbm [shape: f32[16,128], index: 1, kind: input, shape index: {}]
  %s2 = inlined_call_operand.hbm [shape: f32[16,128], index: 2, kind: output, shape index: {}]
  %s3 = sld [smem:[#allocation0]]
  $region26: #{tpu_custom_call.1} parent=0
    _
  %s5 = ssub.s32 1, %s3
  %s6 = scalar_select 0, %s5, %s3
  $region1: #{tpu_custom_call.1} parent=0
    #allocation2 [shape = 'u8[8192]{0}', space=vmem, size = 0x2000, scoped, tag = 'input window, operand 0, single buffered']
    #allocation3 [shape = 's32[1]{0}', space=sflag, size = 0x4, scoped, tag = 'scoped memory for tpu_custom_call.1']
    #allocation4 [shape = 's32[1]{0}', space=sflag, size = 0x4, scoped, tag = 'scoped memory for tpu_custom_call.1']
    #allocation5 [shape = 'u8[8192]{0}', space=vmem, size = 0x2000, scoped, tag = 'input window, operand 1, single buffered']
    #allocation6 [shape = 's32[1]{0}', space=sflag, size = 0x4, scoped, tag = 'scoped memory for tpu_custom_call.1']
    #allocation7 [shape = 'u8[8192]{0}', space=vmem, size = 0x2000, scoped, tag = 'output window, operand 0, single buffered']
    %7 = vsyncpa [#allocation3], 0
    %8 = vsyncpa [#allocation6], 0
    %9 = vsyncpa [#allocation4], 0
    // Predicated region
    $region2: #{tpu_custom_call.1} parent=1 // pred_check
      _
    $region3: #{tpu_custom_call.1} parent=1 // pred_check_branch
      %11 = sbr.rel (0) target = $region5
    $region4: #{tpu_custom_call.1} parent=1 // pred_region
      %s13 = ssub.s32 256, 256
      %14 = vsyncadd [#allocation3], %s13
      %s15 = sshll.u32 [#allocation2], 4
      %s16 = int_to_ptr.vmem [resolvable:$true] %s15
      %21 = dma.hbm_to_vmem [thread:$0]  %s0, 256, %s16, [#allocation3], 128, 128, 8
    $region5: #{tpu_custom_call.1} parent=1 // pred_fallthru
      _
    // Predicated region
    $region6: #{tpu_custom_call.1} parent=1 // pred_check
      _
    $region7: #{tpu_custom_call.1} parent=1 // pred_check_branch
      %23 = sbr.rel (0) target = $region9
    $region8: #{tpu_custom_call.1} parent=1 // pred_region
      %s25 = ssub.s32 256, 256
      %26 = vsyncadd [#allocation6], %s25
      %s27 = sshll.u32 [#allocation5], 4
      %s28 = int_to_ptr.vmem [resolvable:$true] %s27
      %33 = dma.hbm_to_vmem [thread:$0]  %s1, 256, %s28, [#allocation6], 128, 128, 8
    $region9: #{tpu_custom_call.1} parent=1 // pred_fallthru
      _
    // Predicated region
    $region10: #{tpu_custom_call.1} parent=1 // pred_check
      _
    $region11: #{tpu_custom_call.1} parent=1 // pred_check_branch
      %35 = sbr.rel (0) target = $region13
    $region12: #{tpu_custom_call.1} parent=1 // pred_region
      %36 = dma.done [#allocation3], 256
    $region13: #{tpu_custom_call.1} parent=1 // pred_fallthru
      _
    // Predicated region
    $region14: #{tpu_custom_call.1} parent=1 // pred_check
      _
    $region15: #{tpu_custom_call.1} parent=1 // pred_check_branch
      %38 = sbr.rel (0) target = $region17
    $region16: #{tpu_custom_call.1} parent=1 // pred_region
      %39 = dma.done [#allocation6], 256
    $region17: #{tpu_custom_call.1} parent=1 // pred_fallthru
      _
    %v40 = vld [vmem:[#allocation2] sm:$0xff]
    %v41 = vld [vmem:[#allocation2 + $0x8] sm:$0xff]
    %v42 = vld [vmem:[#allocation5] sm:$0xff]
    %v43 = vld [vmem:[#allocation5 + $0x8] sm:$0xff]
    %v44 = vadd.f32 %v40, %v42
    %v45 = vadd.f32 %v41, %v43
    %46 = vst [vmem:[#allocation7] sm:$0xff] %v44
    %47 = vst [vmem:[#allocation7 + $0x8] sm:$0xff] %v45
    // Predicated region
    $region18: #{tpu_custom_call.1} parent=1 // pred_check
      _
    $region19: #{tpu_custom_call.1} parent=1 // pred_check_branch
      %49 = sbr.rel (0) target = $region21
    $region20: #{tpu_custom_call.1} parent=1 // pred_region
      %s51 = ssub.s32 256, 256
      %52 = vsyncadd [#allocation4], %s51
      %s53 = sshll.u32 [#allocation7], 4
      %s54 = int_to_ptr.vmem [resolvable:$true] %s53
      %59 = dma.vmem_to_hbm [thread:$0]  %s54, 256, %s2, [#allocation4], 128, 128, 8
    $region21: #{tpu_custom_call.1} parent=1 // pred_fallthru
      _
    // Predicated region
    $region22: #{tpu_custom_call.1} parent=1 // pred_check
      _
    $region23: #{tpu_custom_call.1} parent=1 // pred_check_branch
      %61 = sbr.rel (0) target = $region25
    $region24: #{tpu_custom_call.1} parent=1 // pred_region
      %62 = dma.done [#allocation4], 256
    $region25: #{tpu_custom_call.1} parent=1 // pred_fallthru
      _
    %63 = vsyncpa [#allocation3], 1
    %64 = vsyncpa [#allocation6], 1
    %65 = vsyncpa [#allocation4], 1

</llo_original>
